<compile_context>
chip_gen: v5e
topology: v5e:2x2
jax: 0.10.0
libtpu: 0.0.40
codegen_flags: <defaults>
</compile_context>

<pallas_src>
import jax
import jax.numpy as jnp
from jax.experimental import pallas as pl
from jax.experimental.pallas import tpu as pltpu

LANE = 128    # lane width: feature dims are padded to multiples of this
SUBLANE = 8   # sublane width: batch tiles are multiples of this


def _round_up(n, m):
    return ((n + m - 1) // m) * m


# ---------------------------------------------------------------------------
# Kernel
# ---------------------------------------------------------------------------
def _feature_extractor_kernel(x_ref, w1_ref, b1_ref, w2_ref, b2_ref, o_ref):
    # Layer 1: Linear -> Dropout (identity in eval) -> ReLU
    x = x_ref[...].astype(jnp.bfloat16)                        # bf16 MXU operand
    h = jnp.dot(x, w1_ref[...], preferred_element_type=jnp.float32)
    h = jnp.maximum(h + b1_ref[...], 0.0)                      # f32 bias + ReLU

    # Layer 2: Linear -> Dropout (identity in eval) -> ReLU
    h2 = jnp.dot(h.astype(jnp.bfloat16), w2_ref[...],
                 preferred_element_type=jnp.float32)
    o_ref[...] = jnp.maximum(h2 + b2_ref[...], 0.0).astype(o_ref.dtype)
    # TODO(synk): training-mode Dropout (pltpu.prng_seed / prng_random_bits
    # masking) not implemented; this kernel matches eval() semantics.


# Explicit index maps (no late-binding loop-variable lambdas).
def _idx_batch(i):
    return (i, 0)


def _idx_const(i):
    return (0, 0)


# ---------------------------------------------------------------------------
# One-time parameter preparation (call once, NOT per forward step)
# ---------------------------------------------------------------------------
def prepare_params(params):
    """Pad feature dims to multiples of 128 and cast weights to bf16, once."""
    in_dim, hidden = params["w1"].shape
    in_p, hid_p = _round_up(in_dim, LANE), _round_up(hidden, LANE)

    def pad2d(a, rows, cols):
        return jnp.pad(a, ((0, rows - a.shape[0]), (0, cols - a.shape[1])))

    return {
        "w1": pad2d(params["w1"], in_p, hid_p).astype(jnp.bfloat16),
        "b1": pad2d(params["b1"], 1, hid_p).astype(jnp.float32),
        "w2": pad2d(params["w2"], hid_p, hid_p).astype(jnp.bfloat16),
        "b2": pad2d(params["b2"], 1, hid_p).astype(jnp.float32),
    }


def _choose_batch_tile(batch, tile_b):
    """Sublane-aligned batch tile; force >= 2 (even) grid steps once the batch
    is non-trivial so v7x's two TensorCores both get work."""
    if batch <= 2 * SUBLANE:
        return _round_up(max(batch, 1), SUBLANE)
    n_tiles = max(2, 2 * pl.cdiv(batch, 2 * tile_b))
    return _round_up(pl.cdiv(batch, n_tiles), SUBLANE)


# ---------------------------------------------------------------------------
# Forward wrapper
# ---------------------------------------------------------------------------
def feature_extractor_forward(x, prepared, *, hidden_size=None, tile_b=512,
                              out_dtype=jnp.float32):
    """x: [B, input_size] (f32 or bf16) -> [B, hidden_size] out_dtype.

    `prepared` must come from prepare_params(): weights already padded and
    bf16, so no per-call weight processing happens here.
    """
    B, in_dim = x.shape
    in_p, hid_p = prepared["w1"].shape
    if hidden_size is None:
        hidden_size = hid_p

    # Feature padding only (no batch pad): zero-copy when already 128-aligned.
    if in_dim != in_p:
        x = jnp.pad(x, ((0, 0), (0, in_p - in_dim)))

    tb = _choose_batch_tile(B, tile_b)
    grid_b = pl.cdiv(B, tb)

    x_bytes = jnp.dtype(x.dtype).itemsize
    out_bytes = jnp.dtype(out_dtype).itemsize

    # VMEM budgeting: single-buffer the constant-index weight blocks once the
    # resident weights get large (matters most on v7x's 64 MiB VMEM), and lift
    # the scoped-VMEM default (16 MiB v5e / 32 MiB v6e+v7x) when needed.
    weight_bytes = (in_p + hid_p) * hid_p * 2 + 2 * hid_p * 4
    single_buffer_weights = weight_bytes > (16 << 20)
    weight_bufs = 1 if single_buffer_weights else 2
    vmem_needed = (2 * tb * (in_p * x_bytes + hid_p * out_bytes)   # streamed x/out
                   + 2 * tb * hid_p * 4                            # f32 intermediates
                   + weight_bufs * weight_bytes)                   # resident weights
    compiler_kwargs = dict(dimension_semantics=("parallel",))
    if vmem_needed > (16 << 20):
        compiler_kwargs["vmem_limit_bytes"] = min(int(vmem_needed * 5 // 4),
                                                  100 << 20)
    # TODO(synk): once resident weights alone exceed ~32-48 MiB (hidden ~4k on
    # v7x), add a K-tiled grid axis ("arbitrary") with an f32 VMEM accumulator
    # instead of keeping both full weight matrices VMEM-resident.

    def _const_spec(shape):
        # Constant-index blocks are loaded once; drop to one buffer when large.
        if single_buffer_weights:
            return pl.BlockSpec(shape, _idx_const, pipeline_mode=pl.Buffered(1))
        return pl.BlockSpec(shape, _idx_const)

    cost = pl.CostEstimate(
        flops=2 * B * (in_p * hid_p + hid_p * hid_p),
        transcendentals=0,
        bytes_accessed=(B * in_p * x_bytes + B * hid_p * out_bytes
                        + (in_p + hid_p) * hid_p * 2 + 2 * hid_p * 4),
    )

    out = pl.pallas_call(
        _feature_extractor_kernel,
        grid=(grid_b,),
        in_specs=[
            pl.BlockSpec((tb, in_p), _idx_batch),      # x: batch-tiled, pipelined
            _const_spec((in_p, hid_p)),                # w1: VMEM-resident
            _const_spec((1, hid_p)),                   # b1: VMEM-resident
            _const_spec((hid_p, hid_p)),               # w2: VMEM-resident
            _const_spec((1, hid_p)),                   # b2: VMEM-resident
        ],
        out_specs=pl.BlockSpec((tb, hid_p), _idx_batch),  # lane-dense stores
        out_shape=jax.ShapeDtypeStruct((B, hid_p), out_dtype),
        compiler_params=pltpu.CompilerParams(**compiler_kwargs),
        cost_estimate=cost,
    )(x, prepared["w1"], prepared["b1"], prepared["w2"], prepared["b2"])

    # Slice the hidden padding only when hidden isn't already 128-aligned.
    if hidden_size != hid_p:
        out = out[:, :hidden_size]
    return out


# ---------------------------------------------------------------------------
# Init + references
# ---------------------------------------------------------------------------
def init_params(key, input_size, hidden_size):
    """torch.nn.Linear default init; weights stored (in, out) so y = x @ W + b."""
    ks = jax.random.split(key, 4)

    def lin(kw, kb, fan_in, fan_out):
        bound = 1.0 / jnp.sqrt(jnp.float32(fan_in))
        w = jax.random.uniform(kw, (fan_in, fan_out), jnp.float32, -bound, bound)
        b = jax.random.uniform(kb, (1, fan_out), jnp.float32, -bound, bound)
        return w, b

    w1, b1 = lin(ks[0], ks[1], input_size, hidden_size)
    w2, b2 = lin(ks[2], ks[3], hidden_size, hidden_size)
    return {"w1": w1, "b1": b1, "w2": w2, "b2": b2}


def reference_forward_f32(x, p):
    """Direct f32 translation of the PyTorch module (eval mode)."""
    h = jnp.maximum(x @ p["w1"] + p["b1"], 0.0)
    return jnp.maximum(h @ p["w2"] + p["b2"], 0.0)


def reference_forward_bf16(x, p):
    """Mirrors the kernel's numerics: bf16 MXU operands, f32 accumulate."""
    w1 = p["w1"].astype(jnp.bfloat16)
    w2 = p["w2"].astype(jnp.bfloat16)
    h = jnp.dot(x.astype(jnp.bfloat16), w1, preferred_element_type=jnp.float32)
    h = jnp.maximum(h + p["b1"], 0.0)
    h = jnp.dot(h.astype(jnp.bfloat16), w2, preferred_element_type=jnp.float32)
    return jnp.maximum(h + p["b2"], 0.0)


if __name__ == "__main__":
    # Non-aligned sizes on purpose: exercises the ragged last batch tile
    # (300 -> 2 tiles of 152) and lane padding (200 -> 256, 96 -> 128).
    B, INPUT_SIZE, HIDDEN_SIZE = 300, 200, 96

    key = jax.random.PRNGKey(0)
    kx, kp = jax.random.split(key)
    x = jax.random.normal(kx, (B, INPUT_SIZE), jnp.float32)
    params = init_params(kp, INPUT_SIZE, HIDDEN_SIZE)
    prepared = prepare_params(params)            # pad + bf16-cast exactly once

    out = jax.block_until_ready(
        feature_extractor_forward(x, prepared, hidden_size=HIDDEN_SIZE))
    assert out.shape == (B, HIDDEN_SIZE), out.shape

    ref_bf16 = reference_forward_bf16(x, params)
    assert jnp.allclose(out, ref_bf16, atol=2e-3, rtol=2e-3), \
        "mismatch vs bf16-matched reference"

    ref_f32 = reference_forward_f32(x, params)
    assert jnp.allclose(out, ref_f32, atol=5e-2, rtol=5e-2), \
        "mismatch vs f32 reference"

    # bf16 I/O path: halves streamed bytes for callers that can take bf16.
    out_bf16 = jax.block_until_ready(
        feature_extractor_forward(x.astype(jnp.bfloat16), prepared,
                                  hidden_size=HIDDEN_SIZE,
                                  out_dtype=jnp.bfloat16))
    assert out_bf16.dtype == jnp.bfloat16 and out_bf16.shape == (B, HIDDEN_SIZE)
    assert jnp.allclose(out_bf16.astype(jnp.float32), out, atol=5e-2, rtol=2e-2), \
        "mismatch between bf16-output path and f32-output path"

    print("KERNEL_OK")
</pallas_src>

<mosaic_0001>
module attributes {stable_mosaic.version = 11 : i64} {
  func.func @_feature_extractor_kernel(%arg0: i32, %arg1: memref<152x256xf32, #tpu.memory_space<vmem>>, %arg2: memref<256x128xbf16, #tpu.memory_space<vmem>>, %arg3: memref<1x128xf32, #tpu.memory_space<vmem>>, %arg4: memref<128x128xbf16, #tpu.memory_space<vmem>>, %arg5: memref<1x128xf32, #tpu.memory_space<vmem>>, %arg6: memref<152x128xf32, #tpu.memory_space<vmem>>) attributes {dimension_semantics = [#tpu.dimension_semantics<parallel>], iteration_bounds = array<i64: 2>, scalar_prefetch = 0 : i64, scratch_operands = 0 : i64, tpu.core_type = #tpu.core_type<tc>, window_params = [{transform_indices = @transform_0, window_bounds = array<i64: 152, 256>}, {pipeline_mode = #tpu.pipeline_mode<synchronous>, transform_indices = @transform_1, window_bounds = array<i64: 256, 128>}, {pipeline_mode = #tpu.pipeline_mode<synchronous>, transform_indices = @transform_2, window_bounds = array<i64: 1, 128>}, {pipeline_mode = #tpu.pipeline_mode<synchronous>, transform_indices = @transform_3, window_bounds = array<i64: 128, 128>}, {pipeline_mode = #tpu.pipeline_mode<synchronous>, transform_indices = @transform_4, window_bounds = array<i64: 1, 128>}, {transform_indices = @transform_5, window_bounds = array<i64: 152, 128>}]} {
    %c0 = arith.constant 0 : index
    %c0_0 = arith.constant 0 : index
    %0 = vector.load %arg1[%c0, %c0_0] : memref<152x256xf32, #tpu.memory_space<vmem>>, vector<152x256xf32>
    %1 = arith.truncf %0 : vector<152x256xf32> to vector<152x256xbf16>
    %c0_1 = arith.constant 0 : index
    %c0_2 = arith.constant 0 : index
    %2 = vector.load %arg2[%c0_1, %c0_2] : memref<256x128xbf16, #tpu.memory_space<vmem>>, vector<256x128xbf16>
    %cst = arith.constant dense<0.000000e+00> : vector<152x128xf32>
    %3 = tpu.matmul %1, %2, %cst {dimension_numbers = #tpu.dot_dimension_numbers<[1], [0], [0], [1], [0, 0, 1, 1], [], []>} : vector<152x256xbf16>, vector<256x128xbf16>, vector<152x128xf32> -> vector<152x128xf32>
    %c0_3 = arith.constant 0 : index
    %c0_4 = arith.constant 0 : index
    %4 = vector.load %arg3[%c0_3, %c0_4] : memref<1x128xf32, #tpu.memory_space<vmem>>, vector<1x128xf32>
    %5 = vector.broadcast %4 : vector<1x128xf32> to vector<152x128xf32>
    %6 = arith.addf %3, %5 : vector<152x128xf32>
    %cst_5 = arith.constant 0.000000e+00 : f32
    %7 = vector.broadcast %cst_5 : f32 to vector<152x128xf32>
    %8 = arith.maximumf %6, %7 : vector<152x128xf32>
    %9 = arith.truncf %8 : vector<152x128xf32> to vector<152x128xbf16>
    %c0_6 = arith.constant 0 : index
    %c0_7 = arith.constant 0 : index
    %10 = vector.load %arg4[%c0_6, %c0_7] : memref<128x128xbf16, #tpu.memory_space<vmem>>, vector<128x128xbf16>
    %cst_8 = arith.constant dense<0.000000e+00> : vector<152x128xf32>
    %11 = tpu.matmul %9, %10, %cst_8 {dimension_numbers = #tpu.dot_dimension_numbers<[1], [0], [0], [1], [0, 0, 1, 1], [], []>} : vector<152x128xbf16>, vector<128x128xbf16>, vector<152x128xf32> -> vector<152x128xf32>
    %c0_9 = arith.constant 0 : index
    %c0_10 = arith.constant 0 : index
    %12 = vector.load %arg5[%c0_9, %c0_10] : memref<1x128xf32, #tpu.memory_space<vmem>>, vector<1x128xf32>
    %13 = vector.broadcast %12 : vector<1x128xf32> to vector<152x128xf32>
    %14 = arith.addf %11, %13 : vector<152x128xf32>
    %cst_11 = arith.constant 0.000000e+00 : f32
    %15 = vector.broadcast %cst_11 : f32 to vector<152x128xf32>
    %16 = arith.maximumf %14, %15 : vector<152x128xf32>
    %c0_12 = arith.constant 0 : index
    %c0_13 = arith.constant 0 : index
    %17 = vector.load %arg6[%c0_12, %c0_13] : memref<152x128xf32, #tpu.memory_space<vmem>>, vector<152x128xf32>
    tpu.vector_store %arg6[%c0_12, %c0_13], %16 {strides = array<i32>} : memref<152x128xf32, #tpu.memory_space<vmem>>, vector<152x128xf32>,
    return
  }
  func.func @transform_0(%arg0: i32) -> (i32, i32) {
    %c0_i32 = arith.constant 0 : i32
    %c0_i32_0 = arith.constant 0 : i32
    return %arg0, %c0_i32 : i32, i32
  }
  func.func @transform_1(%arg0: i32) -> (i32, i32) {
    %c0_i32 = arith.constant 0 : i32
    %c0_i32_0 = arith.constant 0 : i32
    %c0_i32_1 = arith.constant 0 : i32
    return %c0_i32, %c0_i32_0 : i32, i32
  }
  func.func @transform_2(%arg0: i32) -> (i32, i32) {
    %c0_i32 = arith.constant 0 : i32
    %c0_i32_0 = arith.constant 0 : i32
    %c0_i32_1 = arith.constant 0 : i32
    return %c0_i32, %c0_i32_0 : i32, i32
  }
  func.func @transform_3(%arg0: i32) -> (i32, i32) {
    %c0_i32 = arith.constant 0 : i32
    %c0_i32_0 = arith.constant 0 : i32
    %c0_i32_1 = arith.constant 0 : i32
    return %c0_i32, %c0_i32_0 : i32, i32
  }
  func.func @transform_4(%arg0: i32) -> (i32, i32) {
    %c0_i32 = arith.constant 0 : i32
    %c0_i32_0 = arith.constant 0 : i32
    %c0_i32_1 = arith.constant 0 : i32
    return %c0_i32, %c0_i32_0 : i32, i32
  }
  func.func @transform_5(%arg0: i32) -> (i32, i32) {
    %c0_i32 = arith.constant 0 : i32
    %c0_i32_0 = arith.constant 0 : i32
    return %arg0, %c0_i32 : i32, i32
  }
}

</mosaic_0001>

<llo_original>
// kernel: tpu_custom_call.1
$region0: #{tpu_custom_call.1}
  #allocation0 [shape = 'u32[]', space=smem, size = 0x4, offset = 0x4, fixed_abs, tag = 'smem constant byte address 0x4 - core index']
  #allocation1 [shape = 'u32[72,128]{1,0:T(1,128)}', space=vmem, size = 0x9000, scoped, tag = 'internal scratch']
  %s0 = inlined_call_operand.hbm [shape: f32[300,256], index: 0, kind: input, shape index: {}]
  %s1 = inlined_call_operand.hbm [shape: bf16[256,128], index: 1, kind: input, shape index: {}]
  %s2 = inlined_call_operand.vmem [shape: f32[1,128], index: 2, kind: input, shape index: {}]
  %s3 = inlined_call_operand.hbm [shape: bf16[128,128], index: 3, kind: input, shape index: {}]
  %s4 = inlined_call_operand.vmem [shape: f32[1,128], index: 4, kind: input, shape index: {}]
  %s5 = inlined_call_operand.hbm [shape: f32[300,128], index: 5, kind: output, shape index: {}]
  %s6 = sld [smem:[#allocation0]]
  $region65: #{tpu_custom_call.1} parent=0
    _
  %s8 = ssub.s32 1, %s6
  %s9 = scalar_select 0, %s8, %s6
  $region1: #{tpu_custom_call.1} parent=0
    #allocation2 [shape = 'u8[311296]{0}', space=vmem, size = 0x4c000, scoped, tag = 'input window, operand 0']
    #allocation3 [shape = 's32[2]{0}', space=sflag, size = 0x8, scoped, tag = 'scoped memory for tpu_custom_call.1']
    #allocation4 [shape = 's32[2]{0}', space=sflag, size = 0x8, scoped, tag = 'scoped memory for tpu_custom_call.1']
    #allocation5 [shape = 'u8[65536]{0}', space=vmem, size = 0x10000, scoped, tag = 'input window, operand 1, single buffered']
    #allocation6 [shape = 's32[1]{0}', space=sflag, size = 0x4, scoped, tag = 'scoped memory for tpu_custom_call.1']
    #allocation7 [shape = 'u8[32768]{0}', space=vmem, size = 0x8000, scoped, tag = 'input window, operand 3, single buffered']
    #allocation8 [shape = 'u8[155648]{0}', space=vmem, size = 0x26000, scoped, tag = 'output window, operand 0']
    %10 = vsyncpa [#allocation3], 0
    %s11 = scalar_lea.sflag [#allocation3], 1
    %12 = vsyncpa %s11, 0
    %13 = vsyncpa [#allocation6], 0
    %14 = vsyncpa [#allocation4], 0
    %s15 = scalar_lea.sflag [#allocation4], 1
    %16 = vsyncpa %s15, 0
    loop: start=0, step=1, limit=4
    $region2: #{tpu_custom_call.1} parent=1 // loop_pre_header
      _
    $region3: #{tpu_custom_call.1} parent=1 // loop_header
      %s18 = sphi 0, %s22
      %p19 = scmp.ge.s32.totalorder %s18, 4
      %s28 = sphi 0, %s30
      %s31 = sphi 0, %s28
      %s32 = sphi 0, %s31
      %s48 = sphi 0, %s32
      %s52 = sphi 0, %s52
      %s54 = sphi 0, %s52
      %s55 = sphi 0, %s54
      %s69 = sphi 0, %s55
      %s73 = sphi 0, %s73
      %s75 = sphi 0, %s73
      %s76 = sphi 0, %s75
      %s90 = sphi 0, %s76
      %s94 = sphi 0, %s94
      %s96 = sphi 0, %s94
      %s97 = sphi 0, %s96
      %s111 = sphi 0, %s97
      %s115 = sphi 0, %s115
      %s117 = sphi 0, %s115
      %s118 = sphi 0, %s117
      %s132 = sphi 0, %s118
      %s138 = sphi 0, %s140
      %s141 = sphi 0, %s138
      %s142 = sphi 0, %s141
      %s158 = sphi 0, %s142
    $region4: #{tpu_custom_call.1} parent=1 // loop_header_branch
      %21 = sbr.rel (%p19) target = $region8
    $region5: #{tpu_custom_call.1} parent=1 // loop_body
      %s23 = ssub.s32 %s18, 1
      %s24 = ssub.s32 %s18, 2
      %s25 = sadd.s32 %s18, 1
      %s26 = ssub.s32 %s18, %s25
      %p27 = scmp.eq.s32.totalorder %s26, 0
      %s29 = sadd.s32 %s28, 1
      %s30 = scalar_select %p27, %s28, %s29
      %p33 = pneg %p27
      %p34 = scmp.eq.s32.totalorder %s18, 1
      %p35 = por %p33, %p34
      %p36 = scmp.ne.s32.totalorder %s28, %s31
      %p37 = scmp.eq.s32.totalorder %s18, 0
      %p38 = por %p36, %p37
      %p39 = scmp.ne.s32.totalorder %s28, %s31
      %p40 = scmp.eq.s32.totalorder %s23, 1
      %p41 = por %p39, %p40
      %p42 = scmp.ne.s32.totalorder %s31, %s32
      %p43 = scmp.eq.s32.totalorder %s23, 0
      %p44 = por %p42, %p43
      %p45 = scmp.ne.s32.totalorder %s31, %s32
      %p46 = scmp.eq.s32.totalorder %s24, 1
      %p47 = por %p45, %p46
      %p49 = scmp.ne.s32.totalorder %s32, %s48
      %p50 = scmp.eq.s32.totalorder %s24, 0
      %p51 = por %p49, %p50
      %s53 = sadd.s32 %s52, 1
      %p56 = scmp.eq.s32.totalorder %s18, 1
      %p57 = scmp.ne.s32.totalorder %s52, %s54
      %p58 = scmp.eq.s32.totalorder %s18, 0
      %p59 = por %p57, %p58
      %p60 = scmp.ne.s32.totalorder %s52, %s54
      %p61 = scmp.eq.s32.totalorder %s23, 1
      %p62 = por %p60, %p61
      %p63 = scmp.ne.s32.totalorder %s54, %s55
      %p64 = scmp.eq.s32.totalorder %s23, 0
      %p65 = por %p63, %p64
      %p66 = scmp.ne.s32.totalorder %s54, %s55
      %p67 = scmp.eq.s32.totalorder %s24, 1
      %p68 = por %p66, %p67
      %p70 = scmp.ne.s32.totalorder %s55, %s69
      %p71 = scmp.eq.s32.totalorder %s24, 0
      %p72 = por %p70, %p71
      %s74 = sadd.s32 %s73, 1
      %p77 = scmp.eq.s32.totalorder %s18, 1
      %p78 = scmp.ne.s32.totalorder %s73, %s75
      %p79 = scmp.eq.s32.totalorder %s18, 0
      %p80 = por %p78, %p79
      %p81 = scmp.ne.s32.totalorder %s73, %s75
      %p82 = scmp.eq.s32.totalorder %s23, 1
      %p83 = por %p81, %p82
      %p84 = scmp.ne.s32.totalorder %s75, %s76
      %p85 = scmp.eq.s32.totalorder %s23, 0
      %p86 = por %p84, %p85
      %p87 = scmp.ne.s32.totalorder %s75, %s76
      %p88 = scmp.eq.s32.totalorder %s24, 1
      %p89 = por %p87, %p88
      %p91 = scmp.ne.s32.totalorder %s76, %s90
      %p92 = scmp.eq.s32.totalorder %s24, 0
      %p93 = por %p91, %p92
      %s95 = sadd.s32 %s94, 1
      %p98 = scmp.eq.s32.totalorder %s18, 1
      %p99 = scmp.ne.s32.totalorder %s94, %s96
      %p100 = scmp.eq.s32.totalorder %s18, 0
      %p101 = por %p99, %p100
      %p102 = scmp.ne.s32.totalorder %s94, %s96
      %p103 = scmp.eq.s32.totalorder %s23, 1
      %p104 = por %p102, %p103
      %p105 = scmp.ne.s32.totalorder %s96, %s97
      %p106 = scmp.eq.s32.totalorder %s23, 0
      %p107 = por %p105, %p106
      %p108 = scmp.ne.s32.totalorder %s96, %s97
      %p109 = scmp.eq.s32.totalorder %s24, 1
      %p110 = por %p108, %p109
      %p112 = scmp.ne.s32.totalorder %s97, %s111
      %p113 = scmp.eq.s32.totalorder %s24, 0
      %p114 = por %p112, %p113
      %s116 = sadd.s32 %s115, 1
      %p119 = scmp.eq.s32.totalorder %s18, 1
      %p120 = scmp.ne.s32.totalorder %s115, %s117
      %p121 = scmp.eq.s32.totalorder %s18, 0
      %p122 = por %p120, %p121
      %p123 = scmp.ne.s32.totalorder %s115, %s117
      %p124 = scmp.eq.s32.totalorder %s23, 1
      %p125 = por %p123, %p124
      %p126 = scmp.ne.s32.totalorder %s117, %s118
      %p127 = scmp.eq.s32.totalorder %s23, 0
      %p128 = por %p126, %p127
      %p129 = scmp.ne.s32.totalorder %s117, %s118
      %p130 = scmp.eq.s32.totalorder %s24, 1
      %p131 = por %p129, %p130
      %p133 = scmp.ne.s32.totalorder %s118, %s132
      %p134 = scmp.eq.s32.totalorder %s24, 0
      %p135 = por %p133, %p134
      %s136 = ssub.s32 %s18, %s25
      %p137 = scmp.eq.s32.totalorder %s136, 0
      %s139 = sadd.s32 %s138, 1
      %s140 = scalar_select %p137, %s138, %s139
      %p143 = pneg %p137
      %p144 = scmp.eq.s32.totalorder %s18, 1
      %p145 = por %p143, %p144
      %p146 = scmp.ne.s32.totalorder %s138, %s141
      %p147 = scmp.eq.s32.totalorder %s18, 0
      %p148 = por %p146, %p147
      %p149 = scmp.ne.s32.totalorder %s138, %s141
      %p150 = scmp.eq.s32.totalorder %s23, 1
      %p151 = por %p149, %p150
      %p152 = scmp.ne.s32.totalorder %s141, %s142
      %p153 = scmp.eq.s32.totalorder %s23, 0
      %p154 = por %p152, %p153
      %p155 = scmp.ne.s32.totalorder %s141, %s142
      %p156 = scmp.eq.s32.totalorder %s24, 1
      %p157 = por %p155, %p156
      %p159 = scmp.ne.s32.totalorder %s142, %s158
      %p160 = scmp.eq.s32.totalorder %s24, 0
      %p161 = por %p159, %p160
      %p162 = scmp.le.s32.totalorder 1, %s18
      %p163 = scmp.lt.s32.totalorder %s18, 3
      %p164 = pnand %p162, %p163
      %p165 = pneg %p164
      // Predicated region
      $region9: #{tpu_custom_call.1} parent=5 // pred_check
        _
      $region10: #{tpu_custom_call.1} parent=5 // pred_check_branch
        %167 = sbr.rel (%p164) target = $region12
      $region11: #{tpu_custom_call.1} parent=5 // pred_region
        %s168 = ssub.s32 %s18, 1
        // Predicated region
        $region13: #{tpu_custom_call.1} parent=11 // pred_check
          %p169 = pneg %p65
        $region14: #{tpu_custom_call.1} parent=11 // pred_check_branch
          %171 = sbr.rel (%p169) target = $region16
        $region15: #{tpu_custom_call.1} parent=11 // pred_region
          %173 = vsyncadd [#allocation6], 0
          %s174 = sshll.u32 %s1, 4
          %s175 = int_to_ptr.hbm [resolvable:$true] %s174
          %s176 = sshll.u32 [#allocation5], 4
          %s177 = int_to_ptr.vmem [resolvable:$true] %s176
          %182 = dma.hbm_to_vmem [thread:$0]  %s175, 2048, %s177, [#allocation6], 64, 64, 4
        $region16: #{tpu_custom_call.1} parent=11 // pred_fallthru
          _
        // Predicated region
        $region17: #{tpu_custom_call.1} parent=11 // pred_check
          %p183 = pneg %p86
        $region18: #{tpu_custom_call.1} parent=11 // pred_check_branch
          %185 = sbr.rel (%p183) target = $region20
        $region19: #{tpu_custom_call.1} parent=11 // pred_region
          _
        $region20: #{tpu_custom_call.1} parent=11 // pred_fallthru
          _
        // Predicated region
        $region21: #{tpu_custom_call.1} parent=11 // pred_check
          %p186 = pneg %p107
        $region22: #{tpu_custom_call.1} parent=11 // pred_check_branch
          %188 = sbr.rel (%p186) target = $region24
        $region23: #{tpu_custom_call.1} parent=11 // pred_region
          %190 = vsyncadd [#allocation6], 0
          %s191 = sshll.u32 %s3, 4
          %s192 = int_to_ptr.hbm [resolvable:$true] %s191
          %s193 = sshll.u32 [#allocation7], 4
          %s194 = int_to_ptr.vmem [resolvable:$true] %s193
          %199 = dma.hbm_to_vmem [thread:$0]  %s192, 1024, %s194, [#allocation6], 64, 64, 4
        $region24: #{tpu_custom_call.1} parent=11 // pred_fallthru
          _
        // Predicated region
        $region25: #{tpu_custom_call.1} parent=11 // pred_check
          %p200 = pneg %p128
        $region26: #{tpu_custom_call.1} parent=11 // pred_check_branch
          %202 = sbr.rel (%p200) target = $region28
        $region27: #{tpu_custom_call.1} parent=11 // pred_region
          _
        $region28: #{tpu_custom_call.1} parent=11 // pred_fallthru
          _
      $region12: #{tpu_custom_call.1} parent=5 // pred_fallthru
        _
      %p203 = scmp.lt.s32.totalorder %s18, 2
      // Predicated region
      $region29: #{tpu_custom_call.1} parent=5 // pred_check
        %p204 = pneg %p203
      $region30: #{tpu_custom_call.1} parent=5 // pred_check_branch
        %206 = sbr.rel (%p204) target = $region32
      $region31: #{tpu_custom_call.1} parent=5 // pred_region
        // Predicated region
        $region33: #{tpu_custom_call.1} parent=31 // pred_check
          %p207 = pneg %p38
        $region34: #{tpu_custom_call.1} parent=31 // pred_check_branch
          %209 = sbr.rel (%p207) target = $region36
        $region35: #{tpu_custom_call.1} parent=31 // pred_region
          %s210 = sand.u32 %s28, 1
          %s211 = scalar_lea.sflag [#allocation3], %s210
          %s212 = sand.u32 %s28, 1
          %s213 = smul.addr %s212, 304
          %s214 = scalar_lea.vmem [#allocation2], %s213
          %s215 = smul.u32 19, %s18
          %217 = vsyncadd %s211, 0
          %s218 = smul.addr %s215, 2
          %s219 = smul.addr %s218, 8
          %s220 = scalar_lea.hbm %s0, %s219
          %s221 = sshll.u32 %s220, 4
          %s222 = int_to_ptr.hbm [resolvable:$true] %s221
          %s223 = sshll.u32 %s214, 4
          %s224 = int_to_ptr.vmem [resolvable:$true] %s223
          %229 = dma.hbm_to_vmem [thread:$0]  %s222, 4864, %s224, %s211, 256, 256, 16
        $region36: #{tpu_custom_call.1} parent=31 // pred_fallthru
          _
      $region32: #{tpu_custom_call.1} parent=5 // pred_fallthru
        _
      %p230 = scmp.le.s32.totalorder 1, %s18
      %p231 = scmp.lt.s32.totalorder %s18, 3
      %p232 = pnand %p230, %p231
      %p233 = pneg %p232
      // Predicated region
      $region37: #{tpu_custom_call.1} parent=5 // pred_check
        _
      $region38: #{tpu_custom_call.1} parent=5 // pred_check_branch
        %235 = sbr.rel (%p232) target = $region40
      $region39: #{tpu_custom_call.1} parent=5 // pred_region
        %s236 = ssub.s32 %s18, 1
        %s237 = sand.u32 %s31, 1
        %s238 = scalar_lea.sflag [#allocation3], %s237
        %s239 = sand.u32 %s31, 1
        %s240 = smul.addr %s239, 304
        %s241 = scalar_lea.vmem [#allocation2], %s240
        // Predicated region
        $region41: #{tpu_custom_call.1} parent=39 // pred_check
          %p242 = pneg %p44
        $region42: #{tpu_custom_call.1} parent=39 // pred_check_branch
          %244 = sbr.rel (%p242) target = $region44
        $region43: #{tpu_custom_call.1} parent=39 // pred_region
          %246 = dma.done %s238, 4864
        $region44: #{tpu_custom_call.1} parent=39 // pred_fallthru
          _
        // Predicated region
        $region45: #{tpu_custom_call.1} parent=39 // pred_check
          %p247 = pneg %p65
        $region46: #{tpu_custom_call.1} parent=39 // pred_check_branch
          %249 = sbr.rel (%p247) target = $region48
        $region47: #{tpu_custom_call.1} parent=39 // pred_region
          %251 = dma.done [#allocation6], 2048
        $region48: #{tpu_custom_call.1} parent=39 // pred_fallthru
          _
        // Predicated region
        $region49: #{tpu_custom_call.1} parent=39 // pred_check
          %p252 = pneg %p107
        $region50: #{tpu_custom_call.1} parent=39 // pred_check_branch
          %254 = sbr.rel (%p252) target = $region52
        $region51: #{tpu_custom_call.1} parent=39 // pred_region
          %256 = dma.done [#allocation6], 1024
        $region52: #{tpu_custom_call.1} parent=39 // pred_fallthru
          _
        %s257 = sand.u32 %s31, 1
        %s258 = scalar_lea.sflag [#allocation3], %s257
        %s259 = sand.u32 %s31, 1
        %s260 = smul.addr %s259, 304
        %s261 = scalar_lea.vmem [#allocation2], %s260
        %p262 = pneg %p44
        %p263 = pneg %p41
        %p264 = pneg %p65
        %p265 = pneg %p62
        %p266 = pneg %p86
        %p267 = pneg %p83
        %p268 = pneg %p107
        %p269 = pneg %p104
        %p270 = pneg %p128
        %p271 = pneg %p125
        %p272 = pneg %p154
        %p273 = pneg %p151
        %s274 = sand.u32 %s141, 1
        %s275 = scalar_lea.sflag [#allocation4], %s274
        %s276 = sand.u32 %s141, 1
        %s277 = smul.addr %s276, 152
        %s278 = scalar_lea.vmem [#allocation8], %s277
        %s279 = smul.u32 19, %s23
        %s280 = smul.u32 19, %s23
        %v281 = vld [vmem:[%s241] sm:$0xff]
        %v282 = vld [vmem:[%s241 + $0x8] sm:$0xff]
        %v283 = vld [vmem:[%s241 + $0x10] sm:$0xff]
        %v284 = vld [vmem:[%s241 + $0x18] sm:$0xff]
        %v285 = vld [vmem:[%s241 + $0x20] sm:$0xff]
        %v286 = vld [vmem:[%s241 + $0x28] sm:$0xff]
        %v287 = vld [vmem:[%s241 + $0x30] sm:$0xff]
        %v288 = vld [vmem:[%s241 + $0x38] sm:$0xff]
        %v289 = vld [vmem:[%s241 + $0x40] sm:$0xff]
        %v290 = vld [vmem:[%s241 + $0x48] sm:$0xff]
        %v291 = vld [vmem:[%s241 + $0x50] sm:$0xff]
        %v292 = vld [vmem:[%s241 + $0x58] sm:$0xff]
        %v293 = vld [vmem:[%s241 + $0x60] sm:$0xff]
        %v294 = vld [vmem:[%s241 + $0x68] sm:$0xff]
        %v295 = vld [vmem:[%s241 + $0x70] sm:$0xff]
        %v296 = vld [vmem:[%s241 + $0x78] sm:$0xff]
        %v297 = vld [vmem:[%s241 + $0x80] sm:$0xff]
        %v298 = vld [vmem:[%s241 + $0x88] sm:$0xff]
        %v299 = vld [vmem:[%s241 + $0x90] sm:$0xff]
        %v300 = vld [vmem:[%s241 + $0x98] sm:$0xff]
        %v301 = vld [vmem:[%s241 + $0xa0] sm:$0xff]
        %v302 = vld [vmem:[%s241 + $0xa8] sm:$0xff]
        %v303 = vld [vmem:[%s241 + $0xb0] sm:$0xff]
        %v304 = vld [vmem:[%s241 + $0xb8] sm:$0xff]
        %v305 = vld [vmem:[%s241 + $0xc0] sm:$0xff]
        %v306 = vld [vmem:[%s241 + $0xc8] sm:$0xff]
        %v307 = vld [vmem:[%s241 + $0xd0] sm:$0xff]
        %v308 = vld [vmem:[%s241 + $0xd8] sm:$0xff]
        %v309 = vld [vmem:[%s241 + $0xe0] sm:$0xff]
        %v310 = vld [vmem:[%s241 + $0xe8] sm:$0xff]
        %v311 = vld [vmem:[%s241 + $0xf0] sm:$0xff]
        %v312 = vld [vmem:[%s241 + $0xf8] sm:$0xff]
        %v313 = vld [vmem:[%s241 + $0x100] sm:$0xff]
        %v314 = vld [vmem:[%s241 + $0x108] sm:$0xff]
        %v315 = vld [vmem:[%s241 + $0x110] sm:$0xff]
        %v316 = vld [vmem:[%s241 + $0x118] sm:$0xff]
        %v317 = vld [vmem:[%s241 + $0x120] sm:$0xff]
        %v318 = vld [vmem:[%s241 + $0x128] sm:$0xff]
        %v319 = vpack.c.bf16 %v283, %v281
        %v320 = vpack.c.bf16 %v284, %v282
        %v321 = vpack.c.bf16 %v287, %v285
        %v322 = vpack.c.bf16 %v288, %v286
        %v323 = vpack.c.bf16 %v291, %v289
        %v324 = vpack.c.bf16 %v292, %v290
        %v325 = vpack.c.bf16 %v295, %v293
        %v326 = vpack.c.bf16 %v296, %v294
        %v327 = vpack.c.bf16 %v299, %v297
        %v328 = vpack.c.bf16 %v300, %v298
        %v329 = vpack.c.bf16 %v303, %v301
        %v330 = vpack.c.bf16 %v304, %v302
        %v331 = vpack.c.bf16 %v307, %v305
        %v332 = vpack.c.bf16 %v308, %v306
        %v333 = vpack.c.bf16 %v311, %v309
        %v334 = vpack.c.bf16 %v312, %v310
        %v335 = vpack.c.bf16 %v315, %v313
        %v336 = vpack.c.bf16 %v316, %v314
        %v337 = vpack.c.bf16 %v317, %v317
        %v338 = vpack.c.bf16 %v318, %v318
        %v339 = vld [vmem:[#allocation5] sm:$0xf]
        %v340 = vld [vmem:[#allocation5 + $0x4] sm:$0xf]
        %v341 = vld [vmem:[#allocation5 + $0x8] sm:$0xf]
        %v342 = vld [vmem:[#allocation5 + $0xc] sm:$0xf]
        %v343 = vld [vmem:[#allocation5 + $0x10] sm:$0xf]
        %v344 = vld [vmem:[#allocation5 + $0x14] sm:$0xf]
        %v345 = vld [vmem:[#allocation5 + $0x18] sm:$0xf]
        %v346 = vld [vmem:[#allocation5 + $0x1c] sm:$0xf]
        %v347 = vld [vmem:[#allocation5 + $0x20] sm:$0xf]
        %v348 = vld [vmem:[#allocation5 + $0x24] sm:$0xf]
        %v349 = vld [vmem:[#allocation5 + $0x28] sm:$0xf]
        %v350 = vld [vmem:[#allocation5 + $0x2c] sm:$0xf]
        %v351 = vld [vmem:[#allocation5 + $0x30] sm:$0xf]
        %v352 = vld [vmem:[#allocation5 + $0x34] sm:$0xf]
        %v353 = vld [vmem:[#allocation5 + $0x38] sm:$0xf]
        %v354 = vld [vmem:[#allocation5 + $0x3c] sm:$0xf]
        %v355 = vld [vmem:[#allocation5 + $0x40] sm:$0xf]
        %v356 = vld [vmem:[#allocation5 + $0x44] sm:$0xf]
        %v357 = vld [vmem:[#allocation5 + $0x48] sm:$0xf]
        %v358 = vld [vmem:[#allocation5 + $0x4c] sm:$0xf]
        %v359 = vld [vmem:[#allocation5 + $0x50] sm:$0xf]
        %v360 = vld [vmem:[#allocation5 + $0x54] sm:$0xf]
        %v361 = vld [vmem:[#allocation5 + $0x58] sm:$0xf]
        %v362 = vld [vmem:[#allocation5 + $0x5c] sm:$0xf]
        %v363 = vld [vmem:[#allocation5 + $0x60] sm:$0xf]
        %v364 = vld [vmem:[#allocation5 + $0x64] sm:$0xf]
        %v365 = vld [vmem:[#allocation5 + $0x68] sm:$0xf]
        %v366 = vld [vmem:[#allocation5 + $0x6c] sm:$0xf]
        %v367 = vld [vmem:[#allocation5 + $0x70] sm:$0xf]
        %v368 = vld [vmem:[#allocation5 + $0x74] sm:$0xf]
        %v369 = vld [vmem:[#allocation5 + $0x78] sm:$0xf]
        %v370 = vld [vmem:[#allocation5 + $0x7c] sm:$0xf]
        %v371 = vld [vmem:[%s2] sm:$0x1]
        %v373 = vperm.slane %v371, 0
        %v407 = vunpack.c.l.b16 %v339
        %v408 = vunpack.c.l.b16 %v340
        %v409 = vunpack.c.l.b16 %v341
        %v410 = vunpack.c.l.b16 %v342
        %v411 = vunpack.c.l.b16 %v343
        %v412 = vunpack.c.l.b16 %v344
        %v413 = vunpack.c.l.b16 %v345
        %v414 = vunpack.c.l.b16 %v346
        %v415 = vunpack.c.l.b16 %v347
        %v416 = vunpack.c.l.b16 %v348
        %v417 = vunpack.c.l.b16 %v349
        %v418 = vunpack.c.l.b16 %v350
        %v419 = vunpack.c.l.b16 %v351
        %v420 = vunpack.c.l.b16 %v352
        %v421 = vunpack.c.l.b16 %v353
        %v422 = vunpack.c.l.b16 %v354
        %v423 = vunpack.c.l.b16 %v355
        %v424 = vunpack.c.l.b16 %v356
        %v425 = vunpack.c.l.b16 %v357
        %v426 = vunpack.c.l.b16 %v358
        %v427 = vunpack.c.l.b16 %v359
        %v428 = vunpack.c.l.b16 %v360
        %v429 = vunpack.c.l.b16 %v361
        %v430 = vunpack.c.l.b16 %v362
        %v431 = vunpack.c.l.b16 %v363
        %v432 = vunpack.c.l.b16 %v364
        %v433 = vunpack.c.l.b16 %v365
        %v434 = vunpack.c.l.b16 %v366
        %v435 = vunpack.c.l.b16 %v367
        %v436 = vunpack.c.l.b16 %v368
        %v437 = vunpack.c.l.b16 %v369
        %v438 = vunpack.c.l.b16 %v370
        %v439 = vpack.c.b16 %v408, %v407
        %v440 = vpack.c.b16 %v410, %v409
        %v441 = vpack.c.b16 %v412, %v411
        %v442 = vpack.c.b16 %v414, %v413
        %v443 = vpack.c.b16 %v416, %v415
        %v444 = vpack.c.b16 %v418, %v417
        %v445 = vpack.c.b16 %v420, %v419
        %v446 = vpack.c.b16 %v422, %v421
        %v447 = vpack.c.b16 %v424, %v423
        %v448 = vpack.c.b16 %v426, %v425
        %v449 = vpack.c.b16 %v428, %v427
        %v450 = vpack.c.b16 %v430, %v429
        %v451 = vpack.c.b16 %v432, %v431
        %v452 = vpack.c.b16 %v434, %v433
        %v453 = vpack.c.b16 %v436, %v435
        %v454 = vpack.c.b16 %v438, %v437
        %471 = vmatpush.bf16.msra.mxu0 %v446
        %472 = vmatpush.bf16.msra.mxu0 %v445
        %473 = vmatpush.bf16.msra.mxu0 %v444
        %474 = vmatpush.bf16.msra.mxu0 %v443
        %475 = vmatpush.bf16.msra.mxu0 %v442
        %476 = vmatpush.bf16.msra.mxu0 %v441
        %477 = vmatpush.bf16.msra.mxu0 %v440
        %478 = vmatpush.bf16.msra.mxu0 %v439
        %479 = vmatmul.bf16.gmra.mxu0 %v319
        %v480 = vpop.f32.mrf.mxu0
        %v481 = vadd.f32 %v373, %v480
        %v482 = vpop.f32.mrf.mxu0
        %v483 = vadd.f32 %v373, %v482
        %484 = vmatmul.bf16.gmra.mxu0 %v321
        %v485 = vpop.f32.mrf.mxu0
        %v486 = vadd.f32 %v373, %v485
        %v487 = vpop.f32.mrf.mxu0
        %v488 = vadd.f32 %v373, %v487
        %489 = vmatmul.bf16.gmra.mxu0 %v323
        %v490 = vpop.f32.mrf.mxu0
        %v491 = vadd.f32 %v373, %v490
        %v492 = vpop.f32.mrf.mxu0
        %v493 = vadd.f32 %v373, %v492
        %494 = vmatmul.bf16.gmra.mxu0 %v325
        %v495 = vpop.f32.mrf.mxu0
        %v496 = vadd.f32 %v373, %v495
        %v497 = vpop.f32.mrf.mxu0
        %v498 = vadd.f32 %v373, %v497
        %499 = vmatmul.bf16.gmra.mxu0 %v327
        %v500 = vpop.f32.mrf.mxu0
        %v501 = vadd.f32 %v373, %v500
        %v502 = vpop.f32.mrf.mxu0
        %v503 = vadd.f32 %v373, %v502
        %504 = vmatmul.bf16.gmra.mxu0 %v329
        %v505 = vpop.f32.mrf.mxu0
        %v506 = vadd.f32 %v373, %v505
        %v507 = vpop.f32.mrf.mxu0
        %v508 = vadd.f32 %v373, %v507
        %509 = vmatmul.bf16.gmra.mxu0 %v331
        %v510 = vpop.f32.mrf.mxu0
        %v511 = vadd.f32 %v373, %v510
        %v512 = vpop.f32.mrf.mxu0
        %v513 = vadd.f32 %v373, %v512
        %514 = vmatmul.bf16.gmra.mxu0 %v333
        %v515 = vpop.f32.mrf.mxu0
        %v516 = vadd.f32 %v373, %v515
        %v517 = vpop.f32.mrf.mxu0
        %v518 = vadd.f32 %v373, %v517
        %519 = vmatmul.bf16.gmra.mxu0 %v335
        %v520 = vpop.f32.mrf.mxu0
        %v521 = vadd.f32 %v373, %v520
        %v522 = vpop.f32.mrf.mxu0
        %v523 = vadd.f32 %v373, %v522
        %524 = vmatmul.bf16.gmra.mxu0 %v337
        %v525 = vpop.f32.mrf.mxu0
        %v526 = vadd.f32 %v373, %v525
        %v527 = vpop.f32.mrf.mxu0
        %528 = vdwg.mxu0
        %529 = vmatpush.bf16.msra.mxu0 %v454
        %530 = vmatpush.bf16.msra.mxu0 %v453
        %531 = vmatpush.bf16.msra.mxu0 %v452
        %532 = vmatpush.bf16.msra.mxu0 %v451
        %533 = vmatpush.bf16.msra.mxu0 %v450
        %534 = vmatpush.bf16.msra.mxu0 %v449
        %535 = vmatpush.bf16.msra.mxu0 %v448
        %536 = vmatpush.bf16.msra.mxu0 %v447
        %537 = vmatmul.bf16.gmra.mxu0 %v320
        %v538 = vpop.f32.mrf.mxu0
        %v539 = vadd.f32 %v481, %v538
        %v540 = vpop.f32.mrf.mxu0
        %v541 = vadd.f32 %v483, %v540
        %542 = vmatmul.bf16.gmra.mxu0 %v322
        %v543 = vpop.f32.mrf.mxu0
        %v544 = vadd.f32 %v486, %v543
        %v545 = vpop.f32.mrf.mxu0
        %v546 = vadd.f32 %v488, %v545
        %547 = vmatmul.bf16.gmra.mxu0 %v324
        %v548 = vpop.f32.mrf.mxu0
        %v549 = vadd.f32 %v491, %v548
        %v550 = vpop.f32.mrf.mxu0
        %v551 = vadd.f32 %v493, %v550
        %552 = vmatmul.bf16.gmra.mxu0 %v326
        %v553 = vpop.f32.mrf.mxu0
        %v554 = vadd.f32 %v496, %v553
        %v555 = vpop.f32.mrf.mxu0
        %v556 = vadd.f32 %v498, %v555
        %557 = vmatmul.bf16.gmra.mxu0 %v328
        %v558 = vpop.f32.mrf.mxu0
        %v559 = vadd.f32 %v501, %v558
        %v560 = vpop.f32.mrf.mxu0
        %v561 = vadd.f32 %v503, %v560
        %562 = vmatmul.bf16.gmra.mxu0 %v330
        %v563 = vpop.f32.mrf.mxu0
        %v564 = vadd.f32 %v506, %v563
        %v565 = vpop.f32.mrf.mxu0
        %v566 = vadd.f32 %v508, %v565
        %567 = vmatmul.bf16.gmra.mxu0 %v332
        %v568 = vpop.f32.mrf.mxu0
        %v569 = vadd.f32 %v511, %v568
        %v570 = vpop.f32.mrf.mxu0
        %v571 = vadd.f32 %v513, %v570
        %572 = vmatmul.bf16.gmra.mxu0 %v334
        %v573 = vpop.f32.mrf.mxu0
        %v574 = vadd.f32 %v516, %v573
        %v575 = vpop.f32.mrf.mxu0
        %v576 = vadd.f32 %v518, %v575
        %577 = vmatmul.bf16.gmra.mxu0 %v336
        %v578 = vpop.f32.mrf.mxu0
        %v579 = vadd.f32 %v521, %v578
        %v580 = vpop.f32.mrf.mxu0
        %v581 = vadd.f32 %v523, %v580
        %582 = vmatmul.bf16.gmra.mxu0 %v338
        %v583 = vpop.f32.mrf.mxu0
        %v584 = vadd.f32 %v526, %v583
        %v585 = vpop.f32.mrf.mxu0
        %586 = vdwg.mxu0
        %v587 = vmax.f32 %v539, 0.0
        %v588 = vmax.f32 %v541, 0.0
        %v589 = vmax.f32 %v544, 0.0
        %v590 = vmax.f32 %v546, 0.0
        %v591 = vmax.f32 %v549, 0.0
        %v592 = vmax.f32 %v551, 0.0
        %v593 = vmax.f32 %v554, 0.0
        %v594 = vmax.f32 %v556, 0.0
        %v595 = vmax.f32 %v559, 0.0
        %v596 = vmax.f32 %v561, 0.0
        %v597 = vmax.f32 %v564, 0.0
        %v598 = vmax.f32 %v566, 0.0
        %v599 = vmax.f32 %v569, 0.0
        %v600 = vmax.f32 %v571, 0.0
        %v601 = vmax.f32 %v574, 0.0
        %v602 = vmax.f32 %v576, 0.0
        %v603 = vmax.f32 %v579, 0.0
        %v604 = vmax.f32 %v581, 0.0
        %v605 = vmax.f32 %v584, 0.0
        %v606 = vpack.c.bf16 %v588, %v587
        %v607 = vpack.c.bf16 %v590, %v589
        %v608 = vpack.c.bf16 %v592, %v591
        %v609 = vpack.c.bf16 %v594, %v593
        %v610 = vpack.c.bf16 %v596, %v595
        %v611 = vpack.c.bf16 %v598, %v597
        %v612 = vpack.c.bf16 %v600, %v599
        %v613 = vpack.c.bf16 %v602, %v601
        %v614 = vpack.c.bf16 %v604, %v603
        %v615 = vpack.c.bf16 %v605, %v605
        %v616 = vld [vmem:[#allocation7] sm:$0xf]
        %v617 = vld [vmem:[#allocation7 + $0x4] sm:$0xf]
        %v618 = vld [vmem:[#allocation7 + $0x8] sm:$0xf]
        %v619 = vld [vmem:[#allocation7 + $0xc] sm:$0xf]
        %v620 = vld [vmem:[#allocation7 + $0x10] sm:$0xf]
        %v621 = vld [vmem:[#allocation7 + $0x14] sm:$0xf]
        %v622 = vld [vmem:[#allocation7 + $0x18] sm:$0xf]
        %v623 = vld [vmem:[#allocation7 + $0x1c] sm:$0xf]
        %v624 = vld [vmem:[#allocation7 + $0x20] sm:$0xf]
        %v625 = vld [vmem:[#allocation7 + $0x24] sm:$0xf]
        %v626 = vld [vmem:[#allocation7 + $0x28] sm:$0xf]
        %v627 = vld [vmem:[#allocation7 + $0x2c] sm:$0xf]
        %v628 = vld [vmem:[#allocation7 + $0x30] sm:$0xf]
        %v629 = vld [vmem:[#allocation7 + $0x34] sm:$0xf]
        %v630 = vld [vmem:[#allocation7 + $0x38] sm:$0xf]
        %v631 = vld [vmem:[#allocation7 + $0x3c] sm:$0xf]
        %v632 = vld [vmem:[%s4] sm:$0x1]
        %v634 = vperm.slane %v632, 0
        %v652 = vunpack.c.l.b16 %v616
        %v653 = vunpack.c.l.b16 %v617
        %v654 = vunpack.c.l.b16 %v618
        %v655 = vunpack.c.l.b16 %v619
        %v656 = vunpack.c.l.b16 %v620
        %v657 = vunpack.c.l.b16 %v621
        %v658 = vunpack.c.l.b16 %v622
        %v659 = vunpack.c.l.b16 %v623
        %v660 = vunpack.c.l.b16 %v624
        %v661 = vunpack.c.l.b16 %v625
        %v662 = vunpack.c.l.b16 %v626
        %v663 = vunpack.c.l.b16 %v627
        %v664 = vunpack.c.l.b16 %v628
        %v665 = vunpack.c.l.b16 %v629
        %v666 = vunpack.c.l.b16 %v630
        %v667 = vunpack.c.l.b16 %v631
        %v668 = vpack.c.b16 %v653, %v652
        %v669 = vpack.c.b16 %v655, %v654
        %v670 = vpack.c.b16 %v657, %v656
        %v671 = vpack.c.b16 %v659, %v658
        %v672 = vpack.c.b16 %v661, %v660
        %v673 = vpack.c.b16 %v663, %v662
        %v674 = vpack.c.b16 %v665, %v664
        %v675 = vpack.c.b16 %v667, %v666
        %684 = vmatpush.bf16.msra.mxu0 %v675
        %685 = vmatpush.bf16.msra.mxu0 %v674
        %686 = vmatpush.bf16.msra.mxu0 %v673
        %687 = vmatpush.bf16.msra.mxu0 %v672
        %688 = vmatpush.bf16.msra.mxu0 %v671
        %689 = vmatpush.bf16.msra.mxu0 %v670
        %690 = vmatpush.bf16.msra.mxu0 %v669
        %691 = vmatpush.bf16.msra.mxu0 %v668
        %692 = vmatmul.bf16.gmra.mxu0 %v606
        %v693 = vpop.f32.mrf.mxu0
        %v694 = vadd.f32 %v634, %v693
        %v695 = vpop.f32.mrf.mxu0
        %v696 = vadd.f32 %v634, %v695
        %697 = vmatmul.bf16.gmra.mxu0 %v607
        %v698 = vpop.f32.mrf.mxu0
        %v699 = vadd.f32 %v634, %v698
        %v700 = vpop.f32.mrf.mxu0
        %v701 = vadd.f32 %v634, %v700
        %702 = vmatmul.bf16.gmra.mxu0 %v608
        %v703 = vpop.f32.mrf.mxu0
        %v704 = vadd.f32 %v634, %v703
        %v705 = vpop.f32.mrf.mxu0
        %v706 = vadd.f32 %v634, %v705
        %707 = vmatmul.bf16.gmra.mxu0 %v609
        %v708 = vpop.f32.mrf.mxu0
        %v709 = vadd.f32 %v634, %v708
        %v710 = vpop.f32.mrf.mxu0
        %v711 = vadd.f32 %v634, %v710
        %712 = vmatmul.bf16.gmra.mxu0 %v610
        %v713 = vpop.f32.mrf.mxu0
        %v714 = vadd.f32 %v634, %v713
        %v715 = vpop.f32.mrf.mxu0
        %v716 = vadd.f32 %v634, %v715
        %717 = vmatmul.bf16.gmra.mxu0 %v611
        %v718 = vpop.f32.mrf.mxu0
        %v719 = vadd.f32 %v634, %v718
        %v720 = vpop.f32.mrf.mxu0
        %v721 = vadd.f32 %v634, %v720
        %722 = vmatmul.bf16.gmra.mxu0 %v612
        %v723 = vpop.f32.mrf.mxu0
        %v724 = vadd.f32 %v634, %v723
        %v725 = vpop.f32.mrf.mxu0
        %v726 = vadd.f32 %v634, %v725
        %727 = vmatmul.bf16.gmra.mxu0 %v613
        %v728 = vpop.f32.mrf.mxu0
        %v729 = vadd.f32 %v634, %v728
        %v730 = vpop.f32.mrf.mxu0
        %v731 = vadd.f32 %v634, %v730
        %732 = vmatmul.bf16.gmra.mxu0 %v614
        %v733 = vpop.f32.mrf.mxu0
        %v734 = vadd.f32 %v634, %v733
        %v735 = vpop.f32.mrf.mxu0
        %v736 = vadd.f32 %v634, %v735
        %737 = vmatmul.bf16.gmra.mxu0 %v615
        %v738 = vpop.f32.mrf.mxu0
        %v739 = vadd.f32 %v634, %v738
        %v740 = vpop.f32.mrf.mxu0
        %741 = vdwg.mxu0
        %v742 = vmax.f32 %v694, 0.0
        %v743 = vmax.f32 %v696, 0.0
        %v744 = vmax.f32 %v699, 0.0
        %v745 = vmax.f32 %v701, 0.0
        %v746 = vmax.f32 %v704, 0.0
        %v747 = vmax.f32 %v706, 0.0
        %v748 = vmax.f32 %v709, 0.0
        %v749 = vmax.f32 %v711, 0.0
        %v750 = vmax.f32 %v714, 0.0
        %v751 = vmax.f32 %v716, 0.0
        %v752 = vmax.f32 %v719, 0.0
        %v753 = vmax.f32 %v721, 0.0
        %v754 = vmax.f32 %v724, 0.0
        %v755 = vmax.f32 %v726, 0.0
        %v756 = vmax.f32 %v729, 0.0
        %v757 = vmax.f32 %v731, 0.0
        %v758 = vmax.f32 %v734, 0.0
        %v759 = vmax.f32 %v736, 0.0
        %v760 = vmax.f32 %v739, 0.0
        %761 = vst [vmem:[%s278] sm:$0xff] %v742
        %762 = vst [vmem:[%s278 + $0x8] sm:$0xff] %v743
        %763 = vst [vmem:[%s278 + $0x10] sm:$0xff] %v744
        %764 = vst [vmem:[%s278 + $0x18] sm:$0xff] %v745
        %765 = vst [vmem:[%s278 + $0x20] sm:$0xff] %v746
        %766 = vst [vmem:[%s278 + $0x28] sm:$0xff] %v747
        %767 = vst [vmem:[%s278 + $0x30] sm:$0xff] %v748
        %768 = vst [vmem:[%s278 + $0x38] sm:$0xff] %v749
        %769 = vst [vmem:[%s278 + $0x40] sm:$0xff] %v750
        %770 = vst [vmem:[%s278 + $0x48] sm:$0xff] %v751
        %771 = vst [vmem:[%s278 + $0x50] sm:$0xff] %v752
        %772 = vst [vmem:[%s278 + $0x58] sm:$0xff] %v753
        %773 = vst [vmem:[%s278 + $0x60] sm:$0xff] %v754
        %774 = vst [vmem:[%s278 + $0x68] sm:$0xff] %v755
        %775 = vst [vmem:[%s278 + $0x70] sm:$0xff] %v756
        %776 = vst [vmem:[%s278 + $0x78] sm:$0xff] %v757
        %777 = vst [vmem:[%s278 + $0x80] sm:$0xff] %v758
        %778 = vst [vmem:[%s278 + $0x88] sm:$0xff] %v759
        %779 = vst [vmem:[%s278 + $0x90] sm:$0xff] %v760
        %s780 = sand.u32 %s141, 1
        %s781 = scalar_lea.sflag [#allocation4], %s780
        %s782 = sand.u32 %s141, 1
        %s783 = smul.addr %s782, 152
        %s784 = scalar_lea.vmem [#allocation8], %s783
        // Predicated region
        $region53: #{tpu_custom_call.1} parent=39 // pred_check
          %p785 = pneg %p151
        $region54: #{tpu_custom_call.1} parent=39 // pred_check_branch
          %787 = sbr.rel (%p785) target = $region56
        $region55: #{tpu_custom_call.1} parent=39 // pred_region
          %s788 = smul.u32 19, %s23
          %790 = vsyncadd %s781, 0
          %s791 = smul.addr %s788, 8
          %s792 = scalar_lea.hbm %s5, %s791
          %s793 = sshll.u32 %s784, 4
          %s794 = int_to_ptr.vmem [resolvable:$true] %s793
          %s795 = sshll.u32 %s792, 4
          %s796 = int_to_ptr.hbm [resolvable:$true] %s795
          %801 = dma.vmem_to_hbm [thread:$0]  %s794, 2432, %s796, %s781, 128, 128, 8
        $region56: #{tpu_custom_call.1} parent=39 // pred_fallthru
          _
      $region40: #{tpu_custom_call.1} parent=5 // pred_fallthru
        _
      %p802 = scmp.le.s32.totalorder 2, %s18
      // Predicated region
      $region57: #{tpu_custom_call.1} parent=5 // pred_check
        %p803 = pneg %p802
      $region58: #{tpu_custom_call.1} parent=5 // pred_check_branch
        %805 = sbr.rel (%p803) target = $region60
      $region59: #{tpu_custom_call.1} parent=5 // pred_region
        %s806 = ssub.s32 %s18, 2
        // Predicated region
        $region61: #{tpu_custom_call.1} parent=59 // pred_check
          %p807 = pneg %p157
        $region62: #{tpu_custom_call.1} parent=59 // pred_check_branch
          %809 = sbr.rel (%p807) target = $region64
        $region63: #{tpu_custom_call.1} parent=59 // pred_region
          %s810 = sand.u32 %s142, 1
          %s811 = scalar_lea.sflag [#allocation4], %s810
          %s812 = sand.u32 %s142, 1
          %s813 = smul.addr %s812, 152
          %s814 = scalar_lea.vmem [#allocation8], %s813
          %816 = dma.done %s811, 2432
        $region64: #{tpu_custom_call.1} parent=59 // pred_fallthru
          _
      $region60: #{tpu_custom_call.1} parent=5 // pred_fallthru
        _
    $region6: #{tpu_custom_call.1} parent=1 // loop_footer
      %s22 = sadd.s32 1, %s18
    $region7: #{tpu_custom_call.1} parent=1 // loop_footer_branch
      %17 = sbr.rel target = $region3
    $region8: #{tpu_custom_call.1} parent=1 // loop_exit
      _
    %817 = vsyncpa [#allocation3], 1
    %s818 = scalar_lea.sflag [#allocation3], 1
    %819 = vsyncpa %s818, 1
    %820 = vsyncpa [#allocation6], 1
    %821 = vsyncpa [#allocation4], 1
    %s822 = scalar_lea.sflag [#allocation4], 1
    %823 = vsyncpa %s822, 1

</llo_original>
